<compile_context>
chip_gen: v7x
topology: tpu7x:2x2x1
jax: 0.10.0
libtpu: 0.0.40
codegen_flags: <defaults>
</compile_context>

<pallas_src>
import functools

import numpy as np

import jax
import jax.numpy as jnp
from jax.experimental import pallas as pl
from jax.experimental.pallas import tpu as pltpu


# ---------------------------------------------------------------------------
# Tiling helpers
# ---------------------------------------------------------------------------

def _vmem_capacity_bytes() -> int:
    """Best-effort per-core VMEM capacity; conservative fallback (v7x: 64 MiB)."""
    try:
        info = pltpu.get_tpu_info()
        for name in ("vmem_capacity_bytes", "vmem_size_bytes", "vmem_bytes"):
            v = getattr(info, name, None)
            if v:
                return int(v)
    except Exception:
        pass
    return 64 << 20


def _pick_row_tile(height: int, width: int, target_elems: int) -> int:
    """Rows per tile: a multiple of 8 dividing H (or H itself), ~<= target elems."""
    if height % 8 != 0:
        return height
    cands = [t for t in range(8, height + 1, 8) if height % t == 0]
    good = [t for t in cands if t * width <= target_elems]
    if not good:
        return 8
    sub = [t for t in good if t < height]   # prefer >1 row-tiles per batch
    return max(sub) if sub else max(good)


def _pick_chunk(width: int):
    """Lane-chunk size (divides W) for the interleave matmul, or None => pad W."""
    if width % 128 == 0:
        return 128
    if width <= 128:
        return width
    best = 1
    for c in range(128, 1, -1):
        if width % c == 0:
            best = c
            break
    # Awkward widths (tiny largest divisor => huge unrolled chunk loop /
    # oversized selector): signal the wrapper to pad W up to a multiple of 128.
    if width // best > 32:
        return None
    return best


def _make_selector(c: int) -> jax.Array:
    """(4c, 2c) bf16 0/1 selector: [px_hi; px_lo; py_hi; py_lo] -> interleaved."""
    sel = np.zeros((4 * c, 2 * c), dtype=np.float32)
    j = np.arange(c)
    sel[j, 2 * j] = 1.0          # px_hi -> even lanes
    sel[c + j, 2 * j] = 1.0      # px_lo -> even lanes
    sel[2 * c + j, 2 * j + 1] = 1.0  # py_hi -> odd lanes
    sel[3 * c + j, 2 * j + 1] = 1.0  # py_lo -> odd lanes
    return jnp.asarray(sel, dtype=jnp.bfloat16)


# ---------------------------------------------------------------------------
# Kernel
# ---------------------------------------------------------------------------

def _project3d_kernel(p_ref, sel_ref, pts_ref, out_ref, *, eps, chunk):
    # p_ref  : SMEM (B, 12) -- scale-folded rows of P = (K @ T)[:3, :]
    # sel_ref: VMEM (4c, 2c) bf16 constant 0/1 selector (resident, fetched once)
    # pts_ref: VMEM (1, 4, TH, W) -- homogeneous camera points
    # out_ref: VMEM (1, TH, 2*W) -- interleaved [x0, y0, x1, y1, ...] per row
    b = pl.program_id(0)

    x_h = pts_ref[0, 0]    # (TH, W)
    y_h = pts_ref[0, 1]
    z_h = pts_ref[0, 2]
    w_h = pts_ref[0, 3]

    def cam_row(r):
        # 4 scalar*vector FMAs on the VPU (P coefficients read from SMEM).
        return (p_ref[b, 4 * r + 0] * x_h + p_ref[b, 4 * r + 1] * y_h
                + p_ref[b, 4 * r + 2] * z_h + p_ref[b, 4 * r + 3] * w_h)

    cam_x = cam_row(0)                       # already scaled by 2/(W-1)
    cam_y = cam_row(1)                       # already scaled by 2/(H-1)
    den = cam_row(2) + eps

    # EUP reciprocal + one Newton step: frees VPU work vs. full-precision
    # reciprocal while keeping ~f32 accuracy (error ~2^-24 rel).
    inv_z = pl.reciprocal(den, approx=True)
    inv_z = inv_z * (2.0 - den * inv_z)

    px = cam_x * inv_z - 1.0
    py = cam_y * inv_z - 1.0

    # bf16-exact hi + small bf16 lo residual so the single-pass bf16 MXU
    # interleave is accurate (selector is exactly 0/1; per-output sum is just
    # hi + lo, accumulated in f32 => reconstruction error ~2^-17 relative).
    px_hi = px.astype(jnp.bfloat16)
    px_lo = (px - px_hi.astype(jnp.float32)).astype(jnp.bfloat16)
    py_hi = py.astype(jnp.bfloat16)
    py_lo = (py - py_hi.astype(jnp.float32)).astype(jnp.bfloat16)

    sel = sel_ref[...]                        # (4c, 2c) bf16

    c = chunk
    w = px.shape[-1]
    for g in range(w // c):
        sl = slice(g * c, (g + 1) * c)
        # One fused bf16 matmul per chunk: (TH, 4c) @ (4c, 2c) -> (TH, 2c).
        a = jnp.concatenate(
            [px_hi[:, sl], px_lo[:, sl], py_hi[:, sl], py_lo[:, sl]], axis=-1)
        out_ref[0, :, 2 * c * g:2 * c * (g + 1)] = jnp.dot(
            a, sel, preferred_element_type=jnp.float32).astype(out_ref.dtype)


# ---------------------------------------------------------------------------
# Wrapper
# ---------------------------------------------------------------------------

def project3d(points, K, T, *, batch_size, height, width, eps=1e-7):
    """Pallas implementation of Project3D.forward.

    points: (B, 4, H*W) float32
    K, T  : (B, 4, 4)   float32
    returns (B, H, W, 2) float32
    """
    B, H, W = batch_size, height, width
    N = H * W
    assert points.shape == (B, 4, N)
    assert K.shape == (B, 4, 4) and T.shape == (B, 4, 4)
    # NOTE: width==1 or height==1 divides by zero below, same as the PyTorch
    # reference.

    hp = jax.lax.Precision.HIGHEST
    # P = (K @ T)[:, :3, :] with the output scales 2/(W-1), 2/(H-1) folded into
    # rows 0 and 1, so the kernel epilogue is just `* inv_z - 1`.
    P = jnp.matmul(K.astype(jnp.float32), T.astype(jnp.float32),
                   precision=hp)[:, :3, :]
    scale = jnp.array([2.0 / (W - 1), 2.0 / (H - 1), 1.0], jnp.float32)
    P_flat = (P * scale[None, :, None]).reshape(B, 12)

    pts4 = points.astype(jnp.float32).reshape(B, 4, H, W)   # free reshape

    # Lane chunk for the interleave; pad awkward widths up to a multiple of 128
    # (padded lanes produce finite garbage and are sliced off afterwards).
    C = _pick_chunk(W)
    Wp = W
    if C is None:
        Wp = ((W + 127) // 128) * 128
        C = 128
        pts4 = jnp.pad(pts4, ((0, 0), (0, 0), (0, 0), (0, Wp - W)))

    # Generation-aware tile size / VMEM budget (v7x has 64 MiB/TC, v5e/v6e 128).
    vmem_cap = _vmem_capacity_bytes()
    target_elems = (512 * 1024) if vmem_cap >= (100 << 20) else (256 * 1024)
    TH = _pick_row_tile(H, Wp, target_elems)
    assert H % TH == 0 and Wp % C == 0
    vmem_limit = int(min(96 << 20, max(32 << 20, (vmem_cap * 3) // 4)))

    sel = _make_selector(C)                  # (4C, 2C) bf16, hoisted constant

    kernel = functools.partial(_project3d_kernel, eps=float(eps), chunk=C)

    cost = pl.CostEstimate(
        flops=int(B * H * Wp * (32 + 16 * C)),
        transcendentals=int(B * H * Wp),
        bytes_accessed=int(B * H * Wp * 4 * (4 + 2) + B * 12 * 4
                           + 4 * C * 2 * C * 2),
    )

    out = pl.pallas_call(
        kernel,
        out_shape=jax.ShapeDtypeStruct((B, H, 2 * Wp), jnp.float32),
        grid_spec=pltpu.PrefetchScalarGridSpec(
            num_scalar_prefetch=0,
            grid=(B, H // TH),
            in_specs=[
                # 12 projection coefficients per batch, resident in SMEM.
                pl.BlockSpec(memory_space=pltpu.MemorySpace.SMEM),
                # Constant interleave selector, resident in VMEM (fetched once).
                pl.BlockSpec((4 * C, 2 * C), lambda b, r: (0, 0)),
                # points: one (TH, W) row-tile of all 4 channels per step.
                pl.BlockSpec((1, 4, TH, Wp), lambda b, r: (b, 0, r, 0)),
            ],
            out_specs=pl.BlockSpec((1, TH, 2 * Wp), lambda b, r: (b, r, 0)),
        ),
        compiler_params=pltpu.CompilerParams(
            dimension_semantics=("parallel", "parallel"),
            vmem_limit_bytes=vmem_limit),
        cost_estimate=cost,
    )(P_flat, sel, pts4)

    # (B, H, 2*Wp) -> (B, H, Wp, 2): pure metadata reshape, no extra HBM pass.
    out = out.reshape(B, H, Wp, 2)
    if Wp != W:
        out = out[:, :, :W, :]
    return out


# ---------------------------------------------------------------------------
# Reference + self-test
# ---------------------------------------------------------------------------

def _reference(points, K, T, batch_size, height, width, eps=1e-7):
    hp = jax.lax.Precision.HIGHEST
    P = jnp.matmul(K, T, precision=hp)[:, :3, :]
    cam = jnp.matmul(P, points, precision=hp)
    pix = cam[:, :2, :] / (cam[:, 2, :][:, None, :] + eps)
    pix = pix.reshape(batch_size, 2, height, width)
    pix = jnp.transpose(pix, (0, 2, 3, 1))
    pix = pix.at[..., 0].divide(width - 1)
    pix = pix.at[..., 1].divide(height - 1)
    return (pix - 0.5) * 2.0


if __name__ == "__main__":
    B, H, W = 2, 16, 16
    N = H * W
    key = jax.random.PRNGKey(0)
    k1, k2, k3 = jax.random.split(key, 3)

    # Homogeneous points with unit last row, positive-ish depth to keep z sane.
    pts_xyz = jax.random.normal(k1, (B, 3, N), dtype=jnp.float32)
    pts_xyz = pts_xyz.at[:, 2, :].set(jnp.abs(pts_xyz[:, 2, :]) + 1.0)
    points = jnp.concatenate(
        [pts_xyz, jnp.ones((B, 1, N), dtype=jnp.float32)], axis=1)

    # Near-identity intrinsics / pose with small perturbations.
    K = (jnp.eye(4, dtype=jnp.float32)[None].repeat(B, axis=0)
         + 0.01 * jax.random.normal(k2, (B, 4, 4), dtype=jnp.float32))
    T = (jnp.eye(4, dtype=jnp.float32)[None].repeat(B, axis=0)
         + 0.01 * jax.random.normal(k3, (B, 4, 4), dtype=jnp.float32))

    out = project3d(points, K, T, batch_size=B, height=H, width=W)
    out = jax.block_until_ready(out)

    ref = _reference(points, K, T, B, H, W)
    assert out.shape == (B, H, W, 2)
    assert jnp.allclose(out, ref, atol=1e-4, rtol=1e-4), (
        float(jnp.max(jnp.abs(out - ref))))

    print("KERNEL_OK")
</pallas_src>

<mosaic_0001>
module attributes {stable_mosaic.version = 11 : i64} {
  func.func @_project3d_kernel(%arg0: i32, %arg1: i32, %arg2: memref<2x12xf32, #tpu.memory_space<smem>>, %arg3: memref<64x32xbf16, #tpu.memory_space<vmem>>, %arg4: memref<1x4x8x16xf32, #tpu.memory_space<vmem>>, %arg5: memref<1x8x32xf32, #tpu.memory_space<vmem>>) attributes {dimension_semantics = [#tpu.dimension_semantics<parallel>, #tpu.dimension_semantics<parallel>], iteration_bounds = array<i64: 2, 2>, scalar_prefetch = 0 : i64, scratch_operands = 0 : i64, tpu.core_type = #tpu.core_type<tc>, window_params = [{transform_indices = @transform_0, window_bounds = array<i64: 2, 12>}, {pipeline_mode = #tpu.pipeline_mode<synchronous>, transform_indices = @transform_1, window_bounds = array<i64: 64, 32>}, {transform_indices = @transform_2, window_bounds = array<i64: 1, 4, 8, 16>}, {transform_indices = @transform_3, window_bounds = array<i64: 1, 8, 32>}]} {
    %c0 = arith.constant 0 : index
    %c0_0 = arith.constant 0 : index
    %c0_1 = arith.constant 0 : index
    %c0_2 = arith.constant 0 : index
    %0 = vector.load %arg4[%c0, %c0_0, %c0_1, %c0_2] : memref<1x4x8x16xf32, #tpu.memory_space<vmem>>, vector<1x1x8x16xf32>
    %1 = vector.shape_cast %0 : vector<1x1x8x16xf32> to vector<8x16xf32>
    %c0_3 = arith.constant 0 : index
    %c1 = arith.constant 1 : index
    %c0_4 = arith.constant 0 : index
    %c0_5 = arith.constant 0 : index
    %2 = vector.load %arg4[%c0_3, %c1, %c0_4, %c0_5] : memref<1x4x8x16xf32, #tpu.memory_space<vmem>>, vector<1x1x8x16xf32>
    %3 = vector.shape_cast %2 : vector<1x1x8x16xf32> to vector<8x16xf32>
    %c0_6 = arith.constant 0 : index
    %c2 = arith.constant 2 : index
    %c0_7 = arith.constant 0 : index
    %c0_8 = arith.constant 0 : index
    %4 = vector.load %arg4[%c0_6, %c2, %c0_7, %c0_8] : memref<1x4x8x16xf32, #tpu.memory_space<vmem>>, vector<1x1x8x16xf32>
    %5 = vector.shape_cast %4 : vector<1x1x8x16xf32> to vector<8x16xf32>
    %c0_9 = arith.constant 0 : index
    %c3 = arith.constant 3 : index
    %c0_10 = arith.constant 0 : index
    %c0_11 = arith.constant 0 : index
    %6 = vector.load %arg4[%c0_9, %c3, %c0_10, %c0_11] : memref<1x4x8x16xf32, #tpu.memory_space<vmem>>, vector<1x1x8x16xf32>
    %7 = vector.shape_cast %6 : vector<1x1x8x16xf32> to vector<8x16xf32>
    %8 = arith.index_cast %arg0 : i32 to index
    %c0_12 = arith.constant 0 : index
    %9 = memref.load %arg2[%8, %c0_12] : memref<2x12xf32, #tpu.memory_space<smem>>
    %10 = vector.broadcast %9 : f32 to vector<8x16xf32>
    %11 = arith.mulf %10, %1 : vector<8x16xf32>
    %12 = arith.index_cast %arg0 : i32 to index
    %c1_13 = arith.constant 1 : index
    %13 = memref.load %arg2[%12, %c1_13] : memref<2x12xf32, #tpu.memory_space<smem>>
    %14 = vector.broadcast %13 : f32 to vector<8x16xf32>
    %15 = arith.mulf %14, %3 : vector<8x16xf32>
    %16 = arith.addf %11, %15 : vector<8x16xf32>
    %17 = arith.index_cast %arg0 : i32 to index
    %c2_14 = arith.constant 2 : index
    %18 = memref.load %arg2[%17, %c2_14] : memref<2x12xf32, #tpu.memory_space<smem>>
    %19 = vector.broadcast %18 : f32 to vector<8x16xf32>
    %20 = arith.mulf %19, %5 : vector<8x16xf32>
    %21 = arith.addf %16, %20 : vector<8x16xf32>
    %22 = arith.index_cast %arg0 : i32 to index
    %c3_15 = arith.constant 3 : index
    %23 = memref.load %arg2[%22, %c3_15] : memref<2x12xf32, #tpu.memory_space<smem>>
    %24 = vector.broadcast %23 : f32 to vector<8x16xf32>
    %25 = arith.mulf %24, %7 : vector<8x16xf32>
    %26 = arith.addf %21, %25 : vector<8x16xf32>
    %27 = arith.index_cast %arg0 : i32 to index
    %c4 = arith.constant 4 : index
    %28 = memref.load %arg2[%27, %c4] : memref<2x12xf32, #tpu.memory_space<smem>>
    %29 = vector.broadcast %28 : f32 to vector<8x16xf32>
    %30 = arith.mulf %29, %1 : vector<8x16xf32>
    %31 = arith.index_cast %arg0 : i32 to index
    %c5 = arith.constant 5 : index
    %32 = memref.load %arg2[%31, %c5] : memref<2x12xf32, #tpu.memory_space<smem>>
    %33 = vector.broadcast %32 : f32 to vector<8x16xf32>
    %34 = arith.mulf %33, %3 : vector<8x16xf32>
    %35 = arith.addf %30, %34 : vector<8x16xf32>
    %36 = arith.index_cast %arg0 : i32 to index
    %c6 = arith.constant 6 : index
    %37 = memref.load %arg2[%36, %c6] : memref<2x12xf32, #tpu.memory_space<smem>>
    %38 = vector.broadcast %37 : f32 to vector<8x16xf32>
    %39 = arith.mulf %38, %5 : vector<8x16xf32>
    %40 = arith.addf %35, %39 : vector<8x16xf32>
    %41 = arith.index_cast %arg0 : i32 to index
    %c7 = arith.constant 7 : index
    %42 = memref.load %arg2[%41, %c7] : memref<2x12xf32, #tpu.memory_space<smem>>
    %43 = vector.broadcast %42 : f32 to vector<8x16xf32>
    %44 = arith.mulf %43, %7 : vector<8x16xf32>
    %45 = arith.addf %40, %44 : vector<8x16xf32>
    %46 = arith.index_cast %arg0 : i32 to index
    %c8 = arith.constant 8 : index
    %47 = memref.load %arg2[%46, %c8] : memref<2x12xf32, #tpu.memory_space<smem>>
    %48 = vector.broadcast %47 : f32 to vector<8x16xf32>
    %49 = arith.mulf %48, %1 : vector<8x16xf32>
    %50 = arith.index_cast %arg0 : i32 to index
    %c9 = arith.constant 9 : index
    %51 = memref.load %arg2[%50, %c9] : memref<2x12xf32, #tpu.memory_space<smem>>
    %52 = vector.broadcast %51 : f32 to vector<8x16xf32>
    %53 = arith.mulf %52, %3 : vector<8x16xf32>
    %54 = arith.addf %49, %53 : vector<8x16xf32>
    %55 = arith.index_cast %arg0 : i32 to index
    %c10 = arith.constant 10 : index
    %56 = memref.load %arg2[%55, %c10] : memref<2x12xf32, #tpu.memory_space<smem>>
    %57 = vector.broadcast %56 : f32 to vector<8x16xf32>
    %58 = arith.mulf %57, %5 : vector<8x16xf32>
    %59 = arith.addf %54, %58 : vector<8x16xf32>
    %60 = arith.index_cast %arg0 : i32 to index
    %c11 = arith.constant 11 : index
    %61 = memref.load %arg2[%60, %c11] : memref<2x12xf32, #tpu.memory_space<smem>>
    %62 = vector.broadcast %61 : f32 to vector<8x16xf32>
    %63 = arith.mulf %62, %7 : vector<8x16xf32>
    %64 = arith.addf %59, %63 : vector<8x16xf32>
    %cst = arith.constant 1.000000e-07 : f32
    %65 = vector.broadcast %cst : f32 to vector<8x16xf32>
    %66 = arith.addf %64, %65 : vector<8x16xf32>
    %67 = tpu.reciprocal %66 {approx = true} : vector<8x16xf32> -> vector<8x16xf32>
    %68 = arith.mulf %66, %67 : vector<8x16xf32>
    %cst_16 = arith.constant 2.000000e+00 : f32
    %69 = vector.broadcast %cst_16 : f32 to vector<8x16xf32>
    %70 = arith.subf %69, %68 : vector<8x16xf32>
    %71 = arith.mulf %67, %70 : vector<8x16xf32>
    %72 = arith.mulf %26, %71 : vector<8x16xf32>
    %cst_17 = arith.constant 1.000000e+00 : f32
    %73 = vector.broadcast %cst_17 : f32 to vector<8x16xf32>
    %74 = arith.subf %72, %73 : vector<8x16xf32>
    %75 = arith.mulf %45, %71 : vector<8x16xf32>
    %cst_18 = arith.constant 1.000000e+00 : f32
    %76 = vector.broadcast %cst_18 : f32 to vector<8x16xf32>
    %77 = arith.subf %75, %76 : vector<8x16xf32>
    %78 = arith.truncf %74 : vector<8x16xf32> to vector<8x16xbf16>
    %79 = arith.extf %78 : vector<8x16xbf16> to vector<8x16xf32>
    %80 = arith.subf %74, %79 : vector<8x16xf32>
    %81 = arith.truncf %80 : vector<8x16xf32> to vector<8x16xbf16>
    %82 = arith.truncf %77 : vector<8x16xf32> to vector<8x16xbf16>
    %83 = arith.extf %82 : vector<8x16xbf16> to vector<8x16xf32>
    %84 = arith.subf %77, %83 : vector<8x16xf32>
    %85 = arith.truncf %84 : vector<8x16xf32> to vector<8x16xbf16>
    %c0_19 = arith.constant 0 : index
    %c0_20 = arith.constant 0 : index
    %86 = vector.load %arg3[%c0_19, %c0_20] : memref<64x32xbf16, #tpu.memory_space<vmem>>, vector<64x32xbf16>
    %87 = tpu.concatenate %78, %81, %82, %85 in 1 : vector<8x16xbf16>, vector<8x16xbf16>, vector<8x16xbf16>, vector<8x16xbf16> -> vector<8x64xbf16>
    %cst_21 = arith.constant dense<0.000000e+00> : vector<8x32xf32>
    %88 = tpu.matmul %87, %86, %cst_21 {dimension_numbers = #tpu.dot_dimension_numbers<[1], [0], [0], [1], [0, 0, 1, 1], [], []>} : vector<8x64xbf16>, vector<64x32xbf16>, vector<8x32xf32> -> vector<8x32xf32>
    %c0_22 = arith.constant 0 : index
    %c0_23 = arith.constant 0 : index
    %c0_24 = arith.constant 0 : index
    %89 = vector.load %arg5[%c0_22, %c0_23, %c0_24] : memref<1x8x32xf32, #tpu.memory_space<vmem>>, vector<1x8x32xf32>
    %90 = vector.shape_cast %89 : vector<1x8x32xf32> to vector<8x32xf32>
    %91 = vector.shape_cast %88 : vector<8x32xf32> to vector<1x8x32xf32>
    tpu.vector_store %arg5[%c0_22, %c0_23, %c0_24], %91 {strides = array<i32>} : memref<1x8x32xf32, #tpu.memory_space<vmem>>, vector<1x8x32xf32>,
    return
  }
  func.func @transform_0(%arg0: i32, %arg1: i32) -> (i32, i32) {
    %c0_i32 = arith.constant 0 : i32
    %c0_i32_0 = arith.constant 0 : i32
    %c0_i32_1 = arith.constant 0 : i32
    return %c0_i32, %c0_i32_0 : i32, i32
  }
  func.func @transform_1(%arg0: i32, %arg1: i32) -> (i32, i32) {
    %c0_i32 = arith.constant 0 : i32
    %c0_i32_0 = arith.constant 0 : i32
    %c0_i32_1 = arith.constant 0 : i32
    return %c0_i32, %c0_i32_0 : i32, i32
  }
  func.func @transform_2(%arg0: i32, %arg1: i32) -> (i32, i32, i32, i32) {
    %c0_i32 = arith.constant 0 : i32
    %c0_i32_0 = arith.constant 0 : i32
    %c0_i32_1 = arith.constant 0 : i32
    return %arg0, %c0_i32, %arg1, %c0_i32_0 : i32, i32, i32, i32
  }
  func.func @transform_3(%arg0: i32, %arg1: i32) -> (i32, i32, i32) {
    %c0_i32 = arith.constant 0 : i32
    %c0_i32_0 = arith.constant 0 : i32
    return %arg0, %arg1, %c0_i32 : i32, i32, i32
  }
}

</mosaic_0001>

<llo_original>
// kernel: tpu_custom_call.1
$region0: #{tpu_custom_call.1}
  #allocation0 [shape = 'u32[]', space=smem, size = 0x4, offset = 0x4, fixed_abs, tag = 'smem constant byte address 0x4 - core index']
  #allocation1 [shape = 'u32[144,128]{1,0:T(1,128)}', space=vmem, size = 0x12000, scoped, tag = 'internal scratch']
  %s0 = inlined_call_operand.vmem [shape: f32[2,12], index: 0, kind: input, shape index: {}]
  %s1 = inlined_call_operand.vmem [shape: bf16[64,32], index: 1, kind: input, shape index: {}]
  %s2 = inlined_call_operand.hbm [shape: f32[2,4,16,16], index: 2, kind: input, shape index: {}]
  %s3 = inlined_call_operand.hbm [shape: f32[2,16,32], index: 3, kind: output, shape index: {}]
  %s4 = sld [smem:[#allocation0]]
  $region53: #{tpu_custom_call.1} parent=0
    _
  %s6 = ssub.s32 1, %s4
  %s7 = scalar_select 0, %s6, %s4
  $region1: #{tpu_custom_call.1} parent=0
    #allocation2 [shape = 'u8[1024]{0}', space=smem, size = 0x400, scoped, tag = 'input window, operand 0, single buffered']
    #allocation3 [shape = 's32[2]{0}', space=sflag, size = 0x8, scoped, tag = 'scoped memory for tpu_custom_call.1']
    #allocation4 [shape = 's32[2]{0}', space=sflag, size = 0x8, scoped, tag = 'scoped memory for tpu_custom_call.1']
    #allocation5 [shape = 's32[2]{0}', space=sflag, size = 0x8, scoped, tag = 'scoped memory for tpu_custom_call.1']
    #allocation6 [shape = 'u8[32768]{0}', space=vmem, size = 0x8000, scoped, tag = 'input window, operand 2']
    #allocation7 [shape = 'u8[8192]{0}', space=vmem, size = 0x2000, scoped, tag = 'output window, operand 0']
    %8 = vsyncpa [#allocation5], 0
    %9 = vsyncpa [#allocation3], 0
    %s10 = scalar_lea.sflag [#allocation3], 1
    %11 = vsyncpa %s10, 0
    %12 = vsyncpa [#allocation4], 0
    %s13 = scalar_lea.sflag [#allocation4], 1
    %14 = vsyncpa %s13, 0
    loop: start=0, step=1, limit=6
    $region2: #{tpu_custom_call.1} parent=1 // loop_pre_header
      _
    $region3: #{tpu_custom_call.1} parent=1 // loop_header
      %s16 = sphi 0, %s20
      %p17 = scmp.ge.s32.totalorder %s16, 6
      %s23 = sphi 0, %s35
      %s24 = sphi 0, %s31
      %s25 = sphi 0, %s23
      %s26 = sphi 0, %s24
      %s27 = sphi 0, %s25
      %s28 = sphi 0, %s26
      %s36 = sphi 0, %s36
      %s38 = sphi 0, %s36
      %s39 = sphi 0, %s38
      %s53 = sphi 0, %s39
      %s57 = sphi 0, %s57
      %s59 = sphi 0, %s57
      %s60 = sphi 0, %s59
      %s74 = sphi 0, %s60
      %s82 = sphi 0, %s84
      %s85 = sphi 0, %s82
      %s86 = sphi 0, %s85
      %s102 = sphi 0, %s86
      %s110 = sphi 0, %s112
      %s113 = sphi 0, %s110
      %s114 = sphi 0, %s113
      %s130 = sphi 0, %s114
    $region4: #{tpu_custom_call.1} parent=1 // loop_header_branch
      %19 = sbr.rel (%p17) target = $region8
    $region5: #{tpu_custom_call.1} parent=1 // loop_body
      %s21 = ssub.s32 %s16, 1
      %s22 = ssub.s32 %s16, 2
      %s29 = sadd.s32 1, %s24
      %p30 = scmp.ge.s32.totalorder %s29, 2
      %s31 = scalar_select %p30, 0, %s29
      %s32 = sadd.s32 1, %s23
      %s33 = scalar_select %p30, %s32, %s23
      %p34 = scmp.ge.s32.totalorder %s33, 2
      %s35 = scalar_select %p34, 0, %s33
      %s37 = sadd.s32 %s36, 1
      %p40 = scmp.eq.s32.totalorder %s16, 3
      %p41 = scmp.ne.s32.totalorder %s36, %s38
      %p42 = scmp.eq.s32.totalorder %s16, 0
      %p43 = por %p41, %p42
      %p44 = scmp.ne.s32.totalorder %s36, %s38
      %p45 = scmp.eq.s32.totalorder %s21, 3
      %p46 = por %p44, %p45
      %p47 = scmp.ne.s32.totalorder %s38, %s39
      %p48 = scmp.eq.s32.totalorder %s21, 0
      %p49 = por %p47, %p48
      %p50 = scmp.ne.s32.totalorder %s38, %s39
      %p51 = scmp.eq.s32.totalorder %s22, 3
      %p52 = por %p50, %p51
      %p54 = scmp.ne.s32.totalorder %s39, %s53
      %p55 = scmp.eq.s32.totalorder %s22, 0
      %p56 = por %p54, %p55
      %s58 = sadd.s32 %s57, 1
      %p61 = scmp.eq.s32.totalorder %s16, 3
      %p62 = scmp.ne.s32.totalorder %s57, %s59
      %p63 = scmp.eq.s32.totalorder %s16, 0
      %p64 = por %p62, %p63
      %p65 = scmp.ne.s32.totalorder %s57, %s59
      %p66 = scmp.eq.s32.totalorder %s21, 3
      %p67 = por %p65, %p66
      %p68 = scmp.ne.s32.totalorder %s59, %s60
      %p69 = scmp.eq.s32.totalorder %s21, 0
      %p70 = por %p68, %p69
      %p71 = scmp.ne.s32.totalorder %s59, %s60
      %p72 = scmp.eq.s32.totalorder %s22, 3
      %p73 = por %p71, %p72
      %p75 = scmp.ne.s32.totalorder %s60, %s74
      %p76 = scmp.eq.s32.totalorder %s22, 0
      %p77 = por %p75, %p76
      %s78 = ssub.s32 %s23, %s35
      %s79 = ssub.s32 %s24, %s31
      %s80 = sor.u32 %s78, %s79
      %p81 = scmp.eq.s32.totalorder %s80, 0
      %s83 = sadd.s32 %s82, 1
      %s84 = scalar_select %p81, %s82, %s83
      %p87 = pneg %p81
      %p88 = scmp.eq.s32.totalorder %s16, 3
      %p89 = por %p87, %p88
      %p90 = scmp.ne.s32.totalorder %s82, %s85
      %p91 = scmp.eq.s32.totalorder %s16, 0
      %p92 = por %p90, %p91
      %p93 = scmp.ne.s32.totalorder %s82, %s85
      %p94 = scmp.eq.s32.totalorder %s21, 3
      %p95 = por %p93, %p94
      %p96 = scmp.ne.s32.totalorder %s85, %s86
      %p97 = scmp.eq.s32.totalorder %s21, 0
      %p98 = por %p96, %p97
      %p99 = scmp.ne.s32.totalorder %s85, %s86
      %p100 = scmp.eq.s32.totalorder %s22, 3
      %p101 = por %p99, %p100
      %p103 = scmp.ne.s32.totalorder %s86, %s102
      %p104 = scmp.eq.s32.totalorder %s22, 0
      %p105 = por %p103, %p104
      %s106 = ssub.s32 %s23, %s35
      %s107 = ssub.s32 %s24, %s31
      %s108 = sor.u32 %s106, %s107
      %p109 = scmp.eq.s32.totalorder %s108, 0
      %s111 = sadd.s32 %s110, 1
      %s112 = scalar_select %p109, %s110, %s111
      %p115 = pneg %p109
      %p116 = scmp.eq.s32.totalorder %s16, 3
      %p117 = por %p115, %p116
      %p118 = scmp.ne.s32.totalorder %s110, %s113
      %p119 = scmp.eq.s32.totalorder %s16, 0
      %p120 = por %p118, %p119
      %p121 = scmp.ne.s32.totalorder %s110, %s113
      %p122 = scmp.eq.s32.totalorder %s21, 3
      %p123 = por %p121, %p122
      %p124 = scmp.ne.s32.totalorder %s113, %s114
      %p125 = scmp.eq.s32.totalorder %s21, 0
      %p126 = por %p124, %p125
      %p127 = scmp.ne.s32.totalorder %s113, %s114
      %p128 = scmp.eq.s32.totalorder %s22, 3
      %p129 = por %p127, %p128
      %p131 = scmp.ne.s32.totalorder %s114, %s130
      %p132 = scmp.eq.s32.totalorder %s22, 0
      %p133 = por %p131, %p132
      %p134 = scmp.le.s32.totalorder 1, %s16
      %p135 = scmp.lt.s32.totalorder %s16, 5
      %p136 = pnand %p134, %p135
      %p137 = pneg %p136
      // Predicated region
      $region9: #{tpu_custom_call.1} parent=5 // pred_check
        _
      $region10: #{tpu_custom_call.1} parent=5 // pred_check_branch
        %139 = sbr.rel (%p136) target = $region12
      $region11: #{tpu_custom_call.1} parent=5 // pred_region
        %s140 = ssub.s32 %s16, 1
        // Predicated region
        $region13: #{tpu_custom_call.1} parent=11 // pred_check
          %p141 = pneg %p49
        $region14: #{tpu_custom_call.1} parent=11 // pred_check_branch
          %143 = sbr.rel (%p141) target = $region16
        $region15: #{tpu_custom_call.1} parent=11 // pred_region
          %s145 = ssub.s32 32, 32
          %146 = vsyncadd [#allocation5], %s145
          %s148 = sshll.u32 %s0, 4
          %s149 = int_to_ptr.vmem [resolvable:$true] %s148
          %151 = dma.vmem_to_smem %s149, 32, [#allocation2], [#allocation5]
        $region16: #{tpu_custom_call.1} parent=11 // pred_fallthru
          _
        // Predicated region
        $region17: #{tpu_custom_call.1} parent=11 // pred_check
          %p152 = pneg %p70
        $region18: #{tpu_custom_call.1} parent=11 // pred_check_branch
          %154 = sbr.rel (%p152) target = $region20
        $region19: #{tpu_custom_call.1} parent=11 // pred_region
          _
        $region20: #{tpu_custom_call.1} parent=11 // pred_fallthru
          _
      $region12: #{tpu_custom_call.1} parent=5 // pred_fallthru
        _
      %p155 = scmp.lt.s32.totalorder %s16, 4
      // Predicated region
      $region21: #{tpu_custom_call.1} parent=5 // pred_check
        %p156 = pneg %p155
      $region22: #{tpu_custom_call.1} parent=5 // pred_check_branch
        %158 = sbr.rel (%p156) target = $region24
      $region23: #{tpu_custom_call.1} parent=5 // pred_region
        // Predicated region
        $region25: #{tpu_custom_call.1} parent=23 // pred_check
          %p159 = pneg %p92
        $region26: #{tpu_custom_call.1} parent=23 // pred_check_branch
          %161 = sbr.rel (%p159) target = $region28
        $region27: #{tpu_custom_call.1} parent=23 // pred_region
          %s162 = sand.u32 %s82, 1
          %s163 = scalar_lea.sflag [#allocation3], %s162
          %s164 = sand.u32 %s82, 1
          %s165 = smul.addr %s164, 32
          %s166 = scalar_lea.vmem [#allocation6], %s165
          %s168 = ssub.s32 512, 512
          %169 = vsyncadd %s163, %s168
          %s170 = smul.addr %s23, 8
          %s171 = sadd.s32 %s24, %s170
          %s172 = smul.addr %s171, 128
          %s173 = scalar_lea.hbm %s2, %s172
          %s174 = sshll.u32 %s166, 4
          %s175 = int_to_ptr.vmem [resolvable:$true] %s174
          %180 = dma.hbm_to_vmem [thread:$0]  %s173, 512, %s175, %s163, 256, 128, 8
        $region28: #{tpu_custom_call.1} parent=23 // pred_fallthru
          _
      $region24: #{tpu_custom_call.1} parent=5 // pred_fallthru
        _
      %p181 = scmp.le.s32.totalorder 1, %s16
      %p182 = scmp.lt.s32.totalorder %s16, 5
      %p183 = pnand %p181, %p182
      %p184 = pneg %p183
      // Predicated region
      $region29: #{tpu_custom_call.1} parent=5 // pred_check
        _
      $region30: #{tpu_custom_call.1} parent=5 // pred_check_branch
        %186 = sbr.rel (%p183) target = $region32
      $region31: #{tpu_custom_call.1} parent=5 // pred_region
        %s187 = ssub.s32 %s16, 1
        // Predicated region
        $region33: #{tpu_custom_call.1} parent=31 // pred_check
          %p188 = pneg %p49
        $region34: #{tpu_custom_call.1} parent=31 // pred_check_branch
          %190 = sbr.rel (%p188) target = $region36
        $region35: #{tpu_custom_call.1} parent=31 // pred_region
          %191 = dma.done [#allocation5], 32
        $region36: #{tpu_custom_call.1} parent=31 // pred_fallthru
          _
        %s192 = sand.u32 %s85, 1
        %s193 = scalar_lea.sflag [#allocation3], %s192
        %s194 = sand.u32 %s85, 1
        %s195 = smul.addr %s194, 32
        %s196 = scalar_lea.vmem [#allocation6], %s195
        // Predicated region
        $region37: #{tpu_custom_call.1} parent=31 // pred_check
          %p197 = pneg %p98
        $region38: #{tpu_custom_call.1} parent=31 // pred_check_branch
          %199 = sbr.rel (%p197) target = $region40
        $region39: #{tpu_custom_call.1} parent=31 // pred_region
          %200 = dma.done %s193, 512
        $region40: #{tpu_custom_call.1} parent=31 // pred_fallthru
          _
        %201 = sfence
        %p202 = pneg %p49
        %p203 = pneg %p46
        %p204 = pneg %p70
        %p205 = pneg %p67
        %s206 = sand.u32 %s85, 1
        %s207 = scalar_lea.sflag [#allocation3], %s206
        %s208 = sand.u32 %s85, 1
        %s209 = smul.addr %s208, 32
        %s210 = scalar_lea.vmem [#allocation6], %s209
        %p211 = pneg %p98
        %p212 = pneg %p95
        %p213 = pneg %p126
        %p214 = pneg %p123
        %s215 = sand.u32 %s113, 1
        %s216 = scalar_lea.sflag [#allocation4], %s215
        %s217 = sand.u32 %s113, 1
        %s218 = smul.addr %s217, 8
        %s219 = scalar_lea.vmem [#allocation7], %s218
        %v221 = vld [vmem:[%s196] sm:$0xff]
        %s222 = scalar_lea.vmem %s196, 8 [#allocation6]
        %v223 = vld [vmem:[%s222] sm:$0xff]
        %s224 = scalar_lea.vmem %s196, 16 [#allocation6]
        %v225 = vld [vmem:[%s224] sm:$0xff]
        %s226 = scalar_lea.vmem %s196, 24 [#allocation6]
        %v227 = vld [vmem:[%s226] sm:$0xff]
        %s228 = smul.u32 %s25, 128
        %s229 = sld [smem:[#allocation2 + %s228]]
        %v230 = vstv %s229
        %v231 = vmul.f32 %v230, %v221
        %s232 = sadd.s32 %s228, 1
        %s233 = sld [smem:[#allocation2 + %s232]]
        %v234 = vstv %s233
        %v235 = vmul.f32 %v234, %v223
        %v236 = vadd.f32 %v231, %v235
        %s237 = sadd.s32 %s228, 2
        %s238 = sld [smem:[#allocation2 + %s237]]
        %v239 = vstv %s238
        %v240 = vmul.f32 %v239, %v225
        %v241 = vadd.f32 %v236, %v240
        %s242 = sadd.s32 %s228, 3
        %s243 = sld [smem:[#allocation2 + %s242]]
        %v244 = vstv %s243
        %v245 = vmul.f32 %v244, %v227
        %v246 = vadd.f32 %v241, %v245
        %s247 = sadd.s32 %s228, 4
        %s248 = sld [smem:[#allocation2 + %s247]]
        %v249 = vstv %s248
        %v250 = vmul.f32 %v249, %v221
        %s251 = sadd.s32 %s228, 5
        %s252 = sld [smem:[#allocation2 + %s251]]
        %v253 = vstv %s252
        %v254 = vmul.f32 %v253, %v223
        %v255 = vadd.f32 %v250, %v254
        %s256 = sadd.s32 %s228, 6
        %s257 = sld [smem:[#allocation2 + %s256]]
        %v258 = vstv %s257
        %v259 = vmul.f32 %v258, %v225
        %v260 = vadd.f32 %v255, %v259
        %s261 = sadd.s32 %s228, 7
        %s262 = sld [smem:[#allocation2 + %s261]]
        %v263 = vstv %s262
        %v264 = vmul.f32 %v263, %v227
        %v265 = vadd.f32 %v260, %v264
        %s266 = sadd.s32 %s228, 8
        %s267 = sld [smem:[#allocation2 + %s266]]
        %v268 = vstv %s267
        %v269 = vmul.f32 %v268, %v221
        %s270 = sadd.s32 %s228, 9
        %s271 = sld [smem:[#allocation2 + %s270]]
        %v272 = vstv %s271
        %v273 = vmul.f32 %v272, %v223
        %v274 = vadd.f32 %v269, %v273
        %s275 = sadd.s32 %s228, 10
        %s276 = sld [smem:[#allocation2 + %s275]]
        %v277 = vstv %s276
        %v278 = vmul.f32 %v277, %v225
        %v279 = vadd.f32 %v274, %v278
        %s280 = sadd.s32 %s228, 11
        %s281 = sld [smem:[#allocation2 + %s280]]
        %v282 = vstv %s281
        %v283 = vmul.f32 %v282, %v227
        %v284 = vadd.f32 %v279, %v283
        %v285 = vadd.f32 %v284, 1e-07
        %v286 = vrcp.pop %v285
        %v287 = vmul.f32 %v285, %v286
        %v288 = vsub.f32 2.0, %v287
        %v289 = vmul.f32 %v286, %v288
        %v290 = vmul.f32 %v246, %v289
        %v291 = vsub.f32 %v290, 1.0
        %v292 = vmul.f32 %v265, %v289
        %v293 = vsub.f32 %v292, 1.0
        %v294 = vpack.c.bf16 %v291, %v291
        %v295 = vunpack.c.l.bf16 %v294
        %v296 = vsub.f32 %v291, %v295
        %v297 = vpack.c.bf16 %v296, %v296
        %v298 = vpack.c.bf16 %v293, %v293
        %v299 = vunpack.c.l.bf16 %v298
        %v300 = vsub.f32 %v293, %v299
        %v301 = vpack.c.bf16 %v300, %v300
        %v302 = vld [vmem:[%s1] sm:$0xf]
        %v303 = vld [vmem:[%s1 + $0x4] sm:$0xf]
        %v304 = vld [vmem:[%s1 + $0x8] sm:$0xf]
        %v305 = vld [vmem:[%s1 + $0xc] sm:$0xf]
        %v306 = vld [vmem:[%s1 + $0x10] sm:$0xf]
        %v307 = vld [vmem:[%s1 + $0x14] sm:$0xf]
        %v308 = vld [vmem:[%s1 + $0x18] sm:$0xf]
        %v309 = vld [vmem:[%s1 + $0x1c] sm:$0xf]
        %311 = vrot.lane.b32.xlu0 %v297, 16
        %v312 = vpop.permute.xlu0 %311
        %314 = vrot.lane.b32.xlu0 %v298, 32
        %v315 = vpop.permute.xlu0 %314
        %317 = vrot.lane.b32.xlu0 %v301, 48
        %v318 = vpop.permute.xlu0 %317
        %vm319 = vcmask 130048
        %v322 = vsel %vm319, %v294, %v312
        %vm323 = vcmask 261120
        %v325 = vsel %vm323, %v322, %v315
        %vm326 = vcmask 392192
        %v328 = vsel %vm326, %v325, %v318
        %v337 = vunpack.c.l.b16 %v302
        %v338 = vunpack.c.l.b16 %v303
        %v339 = vunpack.c.l.b16 %v304
        %v340 = vunpack.c.l.b16 %v305
        %v341 = vunpack.c.l.b16 %v306
        %v342 = vunpack.c.l.b16 %v307
        %v343 = vunpack.c.l.b16 %v308
        %v344 = vunpack.c.l.b16 %v309
        %v345 = vpack.c.b16 %v338, %v337
        %v346 = vpack.c.b16 %v340, %v339
        %v347 = vpack.c.b16 %v342, %v341
        %v348 = vpack.c.b16 %v344, %v343
        %vm353 = vcmask 523264
        %v354 = vsel %vm353, %v328, 0
        %356 = vmatprep.subr.bf16.mxu0 0
        %357 = vmatpush1.bf16.msra.mxu0 %v345
        %358 = vmatprep.subr.bf16.mxu0 0
        %359 = vmatpush1.bf16.msra.mxu0 %v346
        %360 = vmatprep.subr.bf16.mxu0 0
        %361 = vmatpush1.bf16.msra.mxu0 %v347
        %362 = vmatprep.subr.bf16.mxu0 0
        %363 = vmatpush1.bf16.msra.mxu0 %v348
        %364 = vmatprep.subr.bf16.mxu0 0
        %365 = vmatpush1.bf16.msra.mxu0 0
        %366 = vmatprep.subr.bf16.mxu0 0
        %367 = vmatpush1.bf16.msra.mxu0 0
        %368 = vmatprep.subr.bf16.mxu0 0
        %369 = vmatpush1.bf16.msra.mxu0 0
        %370 = vmatprep.subr.bf16.mxu0 0
        %371 = vmatpush1.bf16.msra.mxu0 0
        %372 = vmatprep.subr.bf16.mxu0 0
        %373 = vmatpush1.bf16.msra.mxu0 0
        %374 = vmatprep.subr.bf16.mxu0 0
        %375 = vmatpush1.bf16.msra.mxu0 0
        %376 = vmatprep.subr.bf16.mxu0 0
        %377 = vmatpush1.bf16.msra.mxu0 0
        %378 = vmatprep.subr.bf16.mxu0 0
        %379 = vmatpush1.bf16.msra.mxu0 0
        %380 = vmatprep.subr.bf16.mxu0 0
        %381 = vmatpush1.bf16.msra.mxu0 0
        %382 = vmatprep.subr.bf16.mxu0 0
        %383 = vmatpush1.bf16.msra.mxu0 0
        %384 = vmatprep.subr.bf16.mxu0 0
        %385 = vmatpush1.bf16.msra.mxu0 0
        %386 = vmatprep.subr.bf16.mxu0 0
        %387 = vmatpush1.bf16.msra.mxu0 0
        %388 = vmatprep.mubr.bf16.mxu0 0
        %389 = vmatmul.mubr.bf16.gmra.mrb[0].mxu0 %v354
        %v390 = vpop.f32.mrb[0].mxu0
        %v391 = vadd.f32 0.0, %v390
        %v392 = vpop.f32.mrb[0].mxu0
        %v393 = vpop.f32.mrb[0].mxu0
        %v394 = vpop.f32.mrb[0].mxu0
        %395 = vdwg.mxu0
        %396 = vst.msk [vmem:[%s219] sm:$0xff] %vm323, %v391
        %s397 = sand.u32 %s113, 1
        %s398 = scalar_lea.sflag [#allocation4], %s397
        %s399 = sand.u32 %s113, 1
        %s400 = smul.addr %s399, 8
        %s401 = scalar_lea.vmem [#allocation7], %s400
        // Predicated region
        $region41: #{tpu_custom_call.1} parent=31 // pred_check
          %p402 = pneg %p123
        $region42: #{tpu_custom_call.1} parent=31 // pred_check_branch
          %404 = sbr.rel (%p402) target = $region44
        $region43: #{tpu_custom_call.1} parent=31 // pred_region
          %s406 = ssub.s32 128, 128
          %407 = vsyncadd %s398, %s406
          %s408 = smul.addr %s25, 2
          %s409 = sadd.s32 %s26, %s408
          %s410 = smul.addr %s409, 128
          %s411 = scalar_lea.hbm %s3, %s410
          %s413 = sshll.u32 %s401, 4
          %s414 = int_to_ptr.vmem [resolvable:$true] %s413
          %416 = dma.vmem_to_hbm [thread:$0]  %s414, 128, %s411, %s398
        $region44: #{tpu_custom_call.1} parent=31 // pred_fallthru
          _
      $region32: #{tpu_custom_call.1} parent=5 // pred_fallthru
        _
      %p417 = scmp.le.s32.totalorder 2, %s16
      // Predicated region
      $region45: #{tpu_custom_call.1} parent=5 // pred_check
        %p418 = pneg %p417
      $region46: #{tpu_custom_call.1} parent=5 // pred_check_branch
        %420 = sbr.rel (%p418) target = $region48
      $region47: #{tpu_custom_call.1} parent=5 // pred_region
        %s421 = ssub.s32 %s16, 2
        // Predicated region
        $region49: #{tpu_custom_call.1} parent=47 // pred_check
          %p422 = pneg %p129
        $region50: #{tpu_custom_call.1} parent=47 // pred_check_branch
          %424 = sbr.rel (%p422) target = $region52
        $region51: #{tpu_custom_call.1} parent=47 // pred_region
          %s425 = sand.u32 %s114, 1
          %s426 = scalar_lea.sflag [#allocation4], %s425
          %s427 = sand.u32 %s114, 1
          %s428 = smul.addr %s427, 8
          %s429 = scalar_lea.vmem [#allocation7], %s428
          %430 = dma.done %s426, 128
        $region52: #{tpu_custom_call.1} parent=47 // pred_fallthru
          _
      $region48: #{tpu_custom_call.1} parent=5 // pred_fallthru
        _
    $region6: #{tpu_custom_call.1} parent=1 // loop_footer
      %s20 = sadd.s32 1, %s16
    $region7: #{tpu_custom_call.1} parent=1 // loop_footer_branch
      %15 = sbr.rel target = $region3
    $region8: #{tpu_custom_call.1} parent=1 // loop_exit
      _
    %431 = vsyncpa [#allocation3], 1
    %s432 = scalar_lea.sflag [#allocation3], 1
    %433 = vsyncpa %s432, 1
    %434 = vsyncpa [#allocation4], 1
    %s435 = scalar_lea.sflag [#allocation4], 1
    %436 = vsyncpa %s435, 1
    %437 = vsyncpa [#allocation5], 1
    %s438 = scalar_lea.sflag [#allocation5], 1
    %439 = vsyncpa %s438, 1

</llo_original>
